<compile_context>
chip_gen: v6e
topology: v6e:2x2x1
jax: 0.10.0
libtpu: 0.0.40
codegen_flags: <defaults>
</compile_context>

<pallas_src>
import jax
import jax.numpy as jnp
from jax.experimental import pallas as pl
from jax.experimental.pallas import tpu as pltpu

P_SCALE = (2, 4, 6, 8)
NUM_SCALES = len(P_SCALE)


def _round_up(x, m):
    return -(-x // m) * m


# ---------------------------------------------------------------------------
# kernels
# ---------------------------------------------------------------------------
def _reduce_kernel(x_ref, w_red_ref, b_red_ref, w_proj_ref, cbias_ref,
                   red_ref, proj_ref):
    """reduced = ReLU(x @ W_red + b);
    proj = lane-dense per-scale blocks [reduced @ W_fcl[j].T | 1 | 0-pad]."""
    red = jnp.maximum(
        jnp.dot(x_ref[...], w_red_ref[...], preferred_element_type=jnp.float32)
        + b_red_ref[...], 0.0)                                    # (tm1, Cr)
    red_ref[...] = red
    # one fused matmul for all 4 scales; cbias injects the per-scale count "1"
    paug = jnp.dot(red, w_proj_ref[...],
                   preferred_element_type=jnp.float32) + cbias_ref[...]
    proj_ref[...] = paug.astype(jnp.bfloat16)       # single lane-dense store


def _sgfe_kernel(keys_rq_ref, keys_ck_ref, red_ref, proj_ref, scale_sel_ref,
                 b_fcl_ref, w_fc_ref, w_fcs_ref, b_fcs_ref,
                 w_out_ref, w_lo1a_ref, w_lo1b_ref, w_lo2_ref, b_lo2_ref,
                 out_ref, acc_ref):
    k = pl.program_id(1)
    nscales = keys_rq_ref.shape[0]
    cp = proj_ref.shape[1] // nscales          # per-scale padded width >= Ch+1
    ch = w_fc_ref.shape[0]

    @pl.when(k == 0)
    def _init():
        acc_ref[...] = jnp.zeros_like(acc_ref)

    # --- fused block-diagonal group reduction (dominant O(N^2) work) -------
    # LHS: the 4 per-scale equality masks concatenated along K -> (tm, 4*tk).
    # RHS: the proj column tile masked to each scale's lane block and stacked
    #      along K -> (4*tk, 4*CP).  One wide bf16 MXU matmul (f32 accumulate)
    #      yields all four scales' [group_sum | group_count] at once.
    proj = proj_ref[...]                                     # (tk, 4*CP) bf16
    same = jnp.concatenate(
        [(keys_rq_ref[j] == keys_ck_ref[j]).astype(jnp.bfloat16)
         for j in range(nscales)], axis=1)                   # (tm, 4*tk)
    rhs = jnp.concatenate(
        [proj * scale_sel_ref[j] for j in range(nscales)], axis=0)
    acc_ref[...] += jnp.dot(same, rhs, preferred_element_type=jnp.float32)

    # --- per-row tail once all column tiles have been accumulated ----------
    @pl.when(k == pl.num_programs(1) - 1)
    def _finalize():
        acc = acc_ref[...]                                   # (tm, 4*CP) f32
        atts = []
        feat_s = None
        for j in range(nscales):
            gsum = acc[:, j * cp:j * cp + ch]
            cnt = acc[:, j * cp + ch:j * cp + ch + 1]
            att = jnp.maximum(gsum / cnt + b_fcl_ref[j], 0.0)   # exact mean
            atts.append(att)
            feat_s = att if feat_s is None else feat_s + att

        feat_z = jnp.maximum(
            jnp.dot(feat_s, w_fc_ref[...], preferred_element_type=jnp.float32),
            0.0)
        # all 4 attention heads fused into one (tm,Ch)@(Ch,4*Ch) matmul
        attn = jax.nn.sigmoid(
            jnp.dot(feat_z, w_fcs_ref[...],
                    preferred_element_type=jnp.float32) + b_fcs_ref[...])

        fused = None
        for j in range(nscales):
            term = atts[j] * attn[:, j * ch:(j + 1) * ch]
            fused = term if fused is None else fused + term

        scale_feat = jnp.dot(fused, w_out_ref[...],
                             preferred_element_type=jnp.float32)  # (tm, Cr)

        # linear_output(cat([reduced, scale_feat])): split weight, no concat
        reduced = red_ref[...]
        h = jnp.maximum(
            jnp.dot(reduced, w_lo1a_ref[...], preferred_element_type=jnp.float32)
            + jnp.dot(scale_feat, w_lo1b_ref[...],
                      preferred_element_type=jnp.float32), 0.0)
        proj_out = jnp.dot(h, w_lo2_ref[...],
                           preferred_element_type=jnp.float32) + b_lo2_ref[...]
        out_ref[...] = proj_out.astype(out_ref.dtype)


# ---------------------------------------------------------------------------
# host-side glue (parameter prep, voxel keys, padding) — not the hot path
# ---------------------------------------------------------------------------
def init_params(key, cin, cr, cout, nscales):
    ch = cr // 2
    ks = jax.random.split(key, 11)

    def w(k, shape, scale=0.1):
        return (scale * jax.random.normal(k, shape)).astype(jnp.float32)

    return dict(
        w_red=w(ks[0], (cr, cin)),          b_red=w(ks[1], (1, cr)),
        w_fcl=w(ks[2], (nscales, ch, cr)),  b_fcl=w(ks[3], (nscales, 1, ch)),
        w_fc=w(ks[4], (ch, ch)),
        w_fcs=w(ks[5], (nscales, ch, ch)),  b_fcs=w(ks[6], (nscales, 1, ch)),
        w_out=w(ks[7], (cr, ch)),
        w_lo1=w(ks[8], (cr, 2 * cr)),
        w_lo2=w(ks[9], (cout, cr)),         b_lo2=w(ks[10], (1, cout)),
    )


def _quantized_keys(input_coords, coord_bounds):
    """Collision-free int32 voxel key per point per pooling scale -> (S, N)."""
    b = input_coords[:, 0].astype(jnp.int32)
    xyz = input_coords[:, 1:4].astype(jnp.int32)
    bmax, xmax, ymax, zmax = coord_bounds
    keys = []
    for ps in P_SCALE:
        dx, dy, dz = -(-xmax // ps), -(-ymax // ps), -(-zmax // ps)
        # strides from the real quantized extents -> no silent group merging
        assert bmax * dx * dy * dz < 2 ** 31, "voxel hash overflows int32"
        q = xyz // ps
        keys.append(((b * dx + q[:, 0]) * dy + q[:, 1]) * dz + q[:, 2])
    return jnp.stack(keys, axis=0).astype(jnp.int32)      # all keys >= 0


def _prepare_weights(params, cp, cout_pad):
    cr = params['w_red'].shape[0]
    ch = cr // 2
    s = params['w_fcl'].shape[0]
    cout = params['w_lo2'].shape[0]
    scp = s * cp

    # fused fc_list projection: per-scale block [W_fcl[j].T | 0]; the bias row
    # turns one extra column per scale into the group-count accumulator; the
    # remaining columns are zero lane padding (lane-dense 128-wide layout).
    w_proj = jnp.zeros((cr, scp), jnp.float32)
    cbias = jnp.zeros((1, scp), jnp.float32)
    scale_sel = jnp.zeros((s, 1, scp), jnp.bfloat16)     # block-diag selectors
    for j in range(s):
        w_proj = w_proj.at[:, j * cp:j * cp + ch].set(params['w_fcl'][j].T)
        cbias = cbias.at[0, j * cp + ch].set(1.0)
        scale_sel = scale_sel.at[j, 0, j * cp:(j + 1) * cp].set(1.0)

    w_lo2_p = jnp.zeros((cr, cout_pad), jnp.float32).at[:, :cout].set(
        params['w_lo2'].T)
    b_lo2_p = jnp.zeros((1, cout_pad), jnp.float32).at[:, :cout].set(
        params['b_lo2'])

    return dict(
        w_red_t=params['w_red'].T,                        # (Cin, Cr)
        b_red=params['b_red'],                            # (1, Cr)
        w_proj=w_proj,                                    # (Cr, S*CP)
        cbias=cbias,                                      # (1, S*CP)
        scale_sel=scale_sel,                              # (S, 1, S*CP)
        b_fcl=params['b_fcl'],                            # (S, 1, Ch)
        w_fc_t=params['w_fc'].T,                          # (Ch, Ch)
        w_fcs_cat=jnp.concatenate(
            [params['w_fcs'][j].T for j in range(s)], axis=1),  # (Ch, S*Ch)
        b_fcs_cat=params['b_fcs'].reshape(1, s * ch),     # (1, S*Ch)
        w_out_t=params['w_out'].T,                        # (Ch, Cr)
        w_lo1a_t=params['w_lo1'][:, :cr].T,               # (Cr, Cr)
        w_lo1b_t=params['w_lo1'][:, cr:].T,               # (Cr, Cr)
        w_lo2_t=w_lo2_p,                                  # (Cr, Cout_pad)
        b_lo2_p=b_lo2_p,                                  # (1, Cout_pad)
    )


def _pick_tiles(n, tm, tk, tm1):
    """Clamp tiles to the problem size and align them so tm | tk | tm1
    (pad granule == tm1, all tiles multiples of 128 on the lane-facing axes)."""
    cap = max(256, _round_up(n, 256))
    tm = _round_up(max(128, min(tm, cap)), 128)
    tk = _round_up(max(tm, min(tk, cap)), tm)
    tm1 = _round_up(max(tk, min(tm1, cap)), tk)
    return tm, tk, tm1


def _tile_bytes(shape, itemsize):
    """VMEM footprint of one buffer with (8,128) layout padding."""
    lead = 1
    for d in shape[:-2]:
        lead *= d
    sub = _round_up(shape[-2], 8)
    lane = _round_up(shape[-1], 128)
    return lead * sub * lane * itemsize


def _physical_vmem_bytes():
    try:
        info = pltpu.get_tpu_info()
        for attr in ("vmem_capacity_bytes", "vmem_bytes", "vmem_size_bytes"):
            v = getattr(info, attr, None)
            if v:
                return int(v)
    except Exception:
        pass
    return 64 << 20   # conservative (v7x-sized) fallback


def _vmem_limit_bytes(tm, tk, cr, ch, cp, cout_pad, s):
    scp = s * cp
    total = 0
    # pipelined (double-buffered) operands + output
    for shape, isz in (((s, tm, 1), 4), ((s, 1, tk), 4), ((tm, cr), 4),
                       ((tk, scp), 2), ((tm, cout_pad), 4)):
        total += 2 * _tile_bytes(shape, isz)
    # resident weights / selectors (count twice to stay conservative)
    for shape in ((s, 1, scp), (s, 1, ch), (ch, ch), (ch, s * ch), (1, s * ch),
                  (ch, cr), (cr, cr), (cr, cr), (cr, cout_pad), (1, cout_pad)):
        total += 2 * _tile_bytes(shape, 4)
    # accumulator scratch
    total += _tile_bytes((tm, scp), 4)
    # in-kernel hot-loop temporaries:
    #   concatenated `same` LHS (bf16) + compare-mask intermediates (int)
    total += _tile_bytes((tm, s * tk), 2) + 2 * _tile_bytes((tm, tk), 4)
    #   block-diagonal RHS (bf16) + one masked-proj temp
    total += 2 * _tile_bytes((s * tk, scp), 2)
    # finalize temporaries (atts, attn, fused, h, proj_out): generous allowance
    total += 12 * _tile_bytes((tm, scp), 4)
    total += 8 << 20   # compiler internal scratch headroom

    phys = _physical_vmem_bytes()
    # v7x (64 MiB physical): stay well below; v5e/v6e (128 MiB): allow ~108 MiB.
    ceiling = (52 << 20) if phys <= (64 << 20) else (108 << 20)
    return int(max(min(total, ceiling), 32 << 20))


def sgfe_forward(input_data, input_coords, params, coord_bounds,
                 tm=256, tk=512, tm1=1024):
    """SGFE.forward.  tm/tk tile the row/column point axes of the O(N^2)
    group reduction (pass 2), tm1 tiles the cheap per-point pass 1.  Defaults
    suit v7x; on v5e/v6e (128 MiB VMEM) tm=512 / tk=1024-2048 is reasonable."""
    n, cin = input_data.shape
    cr = params['w_red'].shape[0]
    ch = cr // 2
    cp = _round_up(ch + 1, 32)              # per-scale lane-padded block width
    cout = params['w_lo2'].shape[0]
    cout_pad = _round_up(cout, 128)         # lane-dense output stores
    s = NUM_SCALES
    scp = s * cp

    tm, tk, tm1 = _pick_tiles(n, tm, tk, tm1)
    n_pad = _round_up(n, tm1)               # tm | tk | tm1  =>  granule = tm1
    pad = n_pad - n

    keys = _quantized_keys(input_coords, coord_bounds)          # (S, N)
    x = input_data.astype(jnp.float32)
    if pad:
        # padded points get unique negative sentinel keys -> singleton groups
        # that never touch real ones; their rows are dropped at the end.
        x = jnp.concatenate([x, jnp.zeros((pad, cin), jnp.float32)], axis=0)
        sentinel = -(jnp.arange(pad, dtype=jnp.int32) + 1)
        keys = jnp.concatenate(
            [keys, jnp.broadcast_to(sentinel, (s, pad))], axis=1)
    keys_rq = keys.reshape(s, n_pad, 1)     # per-scale row keys
    keys_ck = keys.reshape(s, 1, n_pad)     # per-scale col keys

    w = _prepare_weights(params, cp, cout_pad)

    # ---- pass 1: feature_reduce + fused per-scale projection (+count col) --
    red, proj = pl.pallas_call(
        _reduce_kernel,
        out_shape=(jax.ShapeDtypeStruct((n_pad, cr), jnp.float32),
                   jax.ShapeDtypeStruct((n_pad, scp), jnp.bfloat16)),
        grid_spec=pltpu.PrefetchScalarGridSpec(
            num_scalar_prefetch=0,
            grid=(n_pad // tm1,),
            in_specs=[
                pl.BlockSpec((tm1, cin), lambda i: (i, 0)),
                pl.BlockSpec((cin, cr), lambda i: (0, 0)),
                pl.BlockSpec((1, cr), lambda i: (0, 0)),
                pl.BlockSpec((cr, scp), lambda i: (0, 0)),
                pl.BlockSpec((1, scp), lambda i: (0, 0)),
            ],
            out_specs=(
                pl.BlockSpec((tm1, cr), lambda i: (i, 0)),
                pl.BlockSpec((tm1, scp), lambda i: (i, 0)),
            )),
        compiler_params=pltpu.CompilerParams(
            dimension_semantics=("parallel",)),
    )(x, w['w_red_t'], w['b_red'], w['w_proj'], w['cbias'])

    # ---- pass 2: tiled group means + attention + output projection ---------
    grid = (n_pad // tm, n_pad // tk)
    n_row = grid[0]
    flops = (2 * n_pad * n_pad * s * scp            # block-diag group matmuls
             + 2 * n_pad * (ch * ch + ch * s * ch + ch * cr
                            + 2 * cr * cr + cr * cout_pad))
    transcendentals = n_pad * s * ch                # sigmoid
    bytes_accessed = (n_row * n_pad * (s * 4 + scp * 2)      # column stream
                      + n_pad * (s * 4 + cr * 4 + cout_pad * 4))

    out = pl.pallas_call(
        _sgfe_kernel,
        out_shape=jax.ShapeDtypeStruct((n_pad, cout_pad), jnp.float32),
        grid_spec=pltpu.PrefetchScalarGridSpec(
            num_scalar_prefetch=0,
            grid=grid,
            in_specs=[
                pl.BlockSpec((s, tm, 1), lambda i, k: (0, i, 0)),
                pl.BlockSpec((s, 1, tk), lambda i, k: (0, 0, k)),
                pl.BlockSpec((tm, cr), lambda i, k: (i, 0)),
                pl.BlockSpec((tk, scp), lambda i, k: (k, 0)),
                pl.BlockSpec((s, 1, scp), lambda i, k: (0, 0, 0)),
                pl.BlockSpec((s, 1, ch), lambda i, k: (0, 0, 0)),
                pl.BlockSpec((ch, ch), lambda i, k: (0, 0)),
                pl.BlockSpec((ch, s * ch), lambda i, k: (0, 0)),
                pl.BlockSpec((1, s * ch), lambda i, k: (0, 0)),
                pl.BlockSpec((ch, cr), lambda i, k: (0, 0)),
                pl.BlockSpec((cr, cr), lambda i, k: (0, 0)),
                pl.BlockSpec((cr, cr), lambda i, k: (0, 0)),
                pl.BlockSpec((cr, cout_pad), lambda i, k: (0, 0)),
                pl.BlockSpec((1, cout_pad), lambda i, k: (0, 0)),
            ],
            out_specs=pl.BlockSpec((tm, cout_pad), lambda i, k: (i, 0)),
            scratch_shapes=[pltpu.VMEM((tm, scp), jnp.float32)]),
        compiler_params=pltpu.CompilerParams(
            dimension_semantics=("parallel", "arbitrary"),
            vmem_limit_bytes=_vmem_limit_bytes(tm, tk, cr, ch, cp, cout_pad, s)),
        cost_estimate=pl.CostEstimate(
            flops=int(flops),
            transcendentals=int(transcendentals),
            bytes_accessed=int(bytes_accessed)),
    )(keys_rq, keys_ck, red, proj, w['scale_sel'],
      w['b_fcl'], w['w_fc_t'], w['w_fcs_cat'], w['b_fcs_cat'],
      w['w_out_t'], w['w_lo1a_t'], w['w_lo1b_t'], w['w_lo2_t'], w['b_lo2_p'])

    return out[:n, :cout]


def sgfe_reference(input_data, input_coords, params, coord_bounds):
    """Pure-JAX reference replicating the PyTorch SGFE.forward semantics."""
    x = input_data.astype(jnp.float32)
    reduced = jax.nn.relu(x @ params['w_red'].T + params['b_red'])
    keys = _quantized_keys(input_coords, coord_bounds)
    atts = []
    for j in range(NUM_SCALES):
        k = keys[j]
        same = (k[:, None] == k[None, :]).astype(jnp.float32)
        mean = (same @ reduced) / jnp.sum(same, axis=1, keepdims=True)
        atts.append(jax.nn.relu(mean @ params['w_fcl'][j].T + params['b_fcl'][j]))
    scale_features = jnp.stack(atts, axis=1)
    feat_s = scale_features.sum(1)
    feat_z = jax.nn.relu(feat_s @ params['w_fc'].T)
    attn = jax.nn.sigmoid(jnp.stack(
        [feat_z @ params['w_fcs'][j].T + params['b_fcs'][j]
         for j in range(NUM_SCALES)], axis=1))
    sf = jnp.sum(scale_features * attn, axis=1) @ params['w_out'].T
    output_f = jnp.concatenate([reduced, sf], axis=1)
    h = jax.nn.relu(output_f @ params['w_lo1'].T)
    return h @ params['w_lo2'].T + params['b_lo2']


if __name__ == "__main__":
    key = jax.random.PRNGKey(0)
    k_data, k_b, k_xyz, k_par = jax.random.split(key, 4)

    # SoftModel wiring: reduce_channels == c_in
    N, C_IN, C_OUT = 200, 32, 20
    B, X, Y, Z = 2, 16, 16, 16
    params = init_params(k_par, C_IN, C_IN, C_OUT, NUM_SCALES)

    input_data = jax.random.normal(k_data, (N, C_IN), dtype=jnp.float32)
    batch_idx = jax.random.randint(k_b, (N, 1), 0, B)
    xyz = jax.random.randint(k_xyz, (N, 3), 0, X)
    input_coords = jnp.concatenate([batch_idx, xyz], axis=1).astype(jnp.int32)

    out = sgfe_forward(input_data, input_coords, params,
                       coord_bounds=(B, X, Y, Z))
    out = jax.block_until_ready(out)

    ref = sgfe_reference(input_data, input_coords, params, (B, X, Y, Z))
    err = float(jnp.max(jnp.abs(out - ref)))
    assert out.shape == (N, C_OUT), out.shape
    assert err < 2e-2, f"max abs error vs reference: {err}"
    print("KERNEL_OK")
</pallas_src>

<mosaic_0001>
module attributes {stable_mosaic.version = 11 : i64} {
  func.func @_reduce_kernel(%arg0: i32, %arg1: memref<256x32xf32, #tpu.memory_space<vmem>>, %arg2: memref<32x32xf32, #tpu.memory_space<vmem>>, %arg3: memref<1x32xf32, #tpu.memory_space<vmem>>, %arg4: memref<32x128xf32, #tpu.memory_space<vmem>>, %arg5: memref<1x128xf32, #tpu.memory_space<vmem>>, %arg6: memref<256x32xf32, #tpu.memory_space<vmem>>, %arg7: memref<256x128xbf16, #tpu.memory_space<vmem>>) attributes {dimension_semantics = [#tpu.dimension_semantics<parallel>], iteration_bounds = array<i64: 1>, scalar_prefetch = 0 : i64, scratch_operands = 0 : i64, tpu.core_type = #tpu.core_type<tc>, window_params = [{transform_indices = @transform_0, window_bounds = array<i64: 256, 32>}, {pipeline_mode = #tpu.pipeline_mode<synchronous>, transform_indices = @transform_1, window_bounds = array<i64: 32, 32>}, {pipeline_mode = #tpu.pipeline_mode<synchronous>, transform_indices = @transform_2, window_bounds = array<i64: 1, 32>}, {pipeline_mode = #tpu.pipeline_mode<synchronous>, transform_indices = @transform_3, window_bounds = array<i64: 32, 128>}, {pipeline_mode = #tpu.pipeline_mode<synchronous>, transform_indices = @transform_4, window_bounds = array<i64: 1, 128>}, {transform_indices = @transform_5, window_bounds = array<i64: 256, 32>}, {transform_indices = @transform_6, window_bounds = array<i64: 256, 128>}]} {
    %c0 = arith.constant 0 : index
    %c0_0 = arith.constant 0 : index
    %0 = vector.load %arg1[%c0, %c0_0] : memref<256x32xf32, #tpu.memory_space<vmem>>, vector<256x32xf32>
    %c0_1 = arith.constant 0 : index
    %c0_2 = arith.constant 0 : index
    %1 = vector.load %arg2[%c0_1, %c0_2] : memref<32x32xf32, #tpu.memory_space<vmem>>, vector<32x32xf32>
    %cst = arith.constant dense<0.000000e+00> : vector<256x32xf32>
    %2 = tpu.matmul %0, %1, %cst {dimension_numbers = #tpu.dot_dimension_numbers<[1], [0], [0], [1], [0, 0, 1, 1], [], []>} : vector<256x32xf32>, vector<32x32xf32>, vector<256x32xf32> -> vector<256x32xf32>
    %c0_3 = arith.constant 0 : index
    %c0_4 = arith.constant 0 : index
    %3 = vector.load %arg3[%c0_3, %c0_4] : memref<1x32xf32, #tpu.memory_space<vmem>>, vector<1x32xf32>
    %4 = vector.broadcast %3 : vector<1x32xf32> to vector<256x32xf32>
    %5 = arith.addf %2, %4 : vector<256x32xf32>
    %cst_5 = arith.constant 0.000000e+00 : f32
    %6 = vector.broadcast %cst_5 : f32 to vector<256x32xf32>
    %7 = arith.maximumf %5, %6 : vector<256x32xf32>
    %c0_6 = arith.constant 0 : index
    %c0_7 = arith.constant 0 : index
    %8 = vector.load %arg6[%c0_6, %c0_7] : memref<256x32xf32, #tpu.memory_space<vmem>>, vector<256x32xf32>
    tpu.vector_store %arg6[%c0_6, %c0_7], %7 {strides = array<i32>} : memref<256x32xf32, #tpu.memory_space<vmem>>, vector<256x32xf32>,
    %c0_8 = arith.constant 0 : index
    %c0_9 = arith.constant 0 : index
    %9 = vector.load %arg4[%c0_8, %c0_9] : memref<32x128xf32, #tpu.memory_space<vmem>>, vector<32x128xf32>
    %cst_10 = arith.constant dense<0.000000e+00> : vector<256x128xf32>
    %10 = tpu.matmul %7, %9, %cst_10 {dimension_numbers = #tpu.dot_dimension_numbers<[1], [0], [0], [1], [0, 0, 1, 1], [], []>} : vector<256x32xf32>, vector<32x128xf32>, vector<256x128xf32> -> vector<256x128xf32>
    %c0_11 = arith.constant 0 : index
    %c0_12 = arith.constant 0 : index
    %11 = vector.load %arg5[%c0_11, %c0_12] : memref<1x128xf32, #tpu.memory_space<vmem>>, vector<1x128xf32>
    %12 = vector.broadcast %11 : vector<1x128xf32> to vector<256x128xf32>
    %13 = arith.addf %10, %12 : vector<256x128xf32>
    %14 = arith.truncf %13 : vector<256x128xf32> to vector<256x128xbf16>
    %c0_13 = arith.constant 0 : index
    %c0_14 = arith.constant 0 : index
    %15 = vector.load %arg7[%c0_13, %c0_14] : memref<256x128xbf16, #tpu.memory_space<vmem>>, vector<256x128xbf16>
    tpu.vector_store %arg7[%c0_13, %c0_14], %14 {strides = array<i32>} : memref<256x128xbf16, #tpu.memory_space<vmem>>, vector<256x128xbf16>,
    return
  }
  func.func @transform_0(%arg0: i32) -> (i32, i32) {
    %c0_i32 = arith.constant 0 : i32
    %c0_i32_0 = arith.constant 0 : i32
    return %arg0, %c0_i32 : i32, i32
  }
  func.func @transform_1(%arg0: i32) -> (i32, i32) {
    %c0_i32 = arith.constant 0 : i32
    %c0_i32_0 = arith.constant 0 : i32
    %c0_i32_1 = arith.constant 0 : i32
    return %c0_i32, %c0_i32_0 : i32, i32
  }
  func.func @transform_2(%arg0: i32) -> (i32, i32) {
    %c0_i32 = arith.constant 0 : i32
    %c0_i32_0 = arith.constant 0 : i32
    %c0_i32_1 = arith.constant 0 : i32
    return %c0_i32, %c0_i32_0 : i32, i32
  }
  func.func @transform_3(%arg0: i32) -> (i32, i32) {
    %c0_i32 = arith.constant 0 : i32
    %c0_i32_0 = arith.constant 0 : i32
    %c0_i32_1 = arith.constant 0 : i32
    return %c0_i32, %c0_i32_0 : i32, i32
  }
  func.func @transform_4(%arg0: i32) -> (i32, i32) {
    %c0_i32 = arith.constant 0 : i32
    %c0_i32_0 = arith.constant 0 : i32
    %c0_i32_1 = arith.constant 0 : i32
    return %c0_i32, %c0_i32_0 : i32, i32
  }
  func.func @transform_5(%arg0: i32) -> (i32, i32) {
    %c0_i32 = arith.constant 0 : i32
    %c0_i32_0 = arith.constant 0 : i32
    return %arg0, %c0_i32 : i32, i32
  }
  func.func @transform_6(%arg0: i32) -> (i32, i32) {
    %c0_i32 = arith.constant 0 : i32
    %c0_i32_0 = arith.constant 0 : i32
    return %arg0, %c0_i32 : i32, i32
  }
}

</mosaic_0001>

<llo_original>
// kernel: tpu_custom_call.1
$region0: #{tpu_custom_call.1}
  #allocation0 [shape = 'u32[]', space=smem, size = 0x4, offset = 0x4, fixed_abs, tag = 'smem constant byte address 0x4 - core index']
  #allocation1 [shape = 'u32[144,128]{1,0:T(1,128)}', space=vmem, size = 0x12000, scoped, tag = 'internal scratch']
  %s0 = inlined_call_operand.vmem [shape: f32[256,32], index: 0, kind: input, shape index: {}]
  %s1 = inlined_call_operand.vmem [shape: f32[32,32], index: 1, kind: input, shape index: {}]
  %s2 = inlined_call_operand.vmem [shape: f32[1,32], index: 2, kind: input, shape index: {}]
  %s3 = inlined_call_operand.vmem [shape: f32[32,128], index: 3, kind: input, shape index: {}]
  %s4 = inlined_call_operand.vmem [shape: f32[1,128], index: 4, kind: input, shape index: {}]
  %s5 = inlined_call_operand.vmem [shape: f32[256,32], index: 5, kind: output, shape index: {0}]
  %s6 = inlined_call_operand.hbm [shape: bf16[256,128], index: 6, kind: output, shape index: {1}]
  %7 = xla_tuple %s5, %s6
  %s8 = sld [smem:[#allocation0]]
  $region38: #{tpu_custom_call.1} parent=0
    _
  %s10 = ssub.s32 1, %s8
  %s11 = scalar_select 0, %s10, %s8
  $region1: #{tpu_custom_call.1} parent=0
    #allocation2 [shape = 'u8[65536]{0}', space=vmem, size = 0x10000, scoped, tag = 'output window, operand 1, single buffered']
    #allocation3 [shape = 's32[1]{0}', space=sflag, size = 0x4, scoped, tag = 'scoped memory for tpu_custom_call.1']
    %12 = vsyncpa [#allocation3], 0
    // Predicated region
    $region2: #{tpu_custom_call.1} parent=1 // pred_check
      _
    $region3: #{tpu_custom_call.1} parent=1 // pred_check_branch
      %14 = sbr.rel (0) target = $region5
    $region4: #{tpu_custom_call.1} parent=1 // pred_region
      _
    $region5: #{tpu_custom_call.1} parent=1 // pred_fallthru
      _
    // Predicated region
    $region6: #{tpu_custom_call.1} parent=1 // pred_check
      _
    $region7: #{tpu_custom_call.1} parent=1 // pred_check_branch
      %16 = sbr.rel (0) target = $region9
    $region8: #{tpu_custom_call.1} parent=1 // pred_region
      _
    $region9: #{tpu_custom_call.1} parent=1 // pred_fallthru
      _
    // Predicated region
    $region10: #{tpu_custom_call.1} parent=1 // pred_check
      _
    $region11: #{tpu_custom_call.1} parent=1 // pred_check_branch
      %18 = sbr.rel (0) target = $region13
    $region12: #{tpu_custom_call.1} parent=1 // pred_region
      _
    $region13: #{tpu_custom_call.1} parent=1 // pred_fallthru
      _
    // Predicated region
    $region14: #{tpu_custom_call.1} parent=1 // pred_check
      _
    $region15: #{tpu_custom_call.1} parent=1 // pred_check_branch
      %20 = sbr.rel (0) target = $region17
    $region16: #{tpu_custom_call.1} parent=1 // pred_region
      _
    $region17: #{tpu_custom_call.1} parent=1 // pred_fallthru
      _
    // Predicated region
    $region18: #{tpu_custom_call.1} parent=1 // pred_check
      _
    $region19: #{tpu_custom_call.1} parent=1 // pred_check_branch
      %22 = sbr.rel (0) target = $region21
    $region20: #{tpu_custom_call.1} parent=1 // pred_region
      _
    $region21: #{tpu_custom_call.1} parent=1 // pred_fallthru
      _
    %v23 = vld [vmem:[%s0] sm:$0xff]
    %v24 = vld [vmem:[%s0 + $0x8] sm:$0xff]
    %v25 = vld [vmem:[%s0 + $0x10] sm:$0xff]
    %v26 = vld [vmem:[%s0 + $0x18] sm:$0xff]
    %v27 = vld [vmem:[%s0 + $0x20] sm:$0xff]
    %v28 = vld [vmem:[%s0 + $0x28] sm:$0xff]
    %v29 = vld [vmem:[%s0 + $0x30] sm:$0xff]
    %v30 = vld [vmem:[%s0 + $0x38] sm:$0xff]
    %v31 = vld [vmem:[%s0 + $0x40] sm:$0xff]
    %v32 = vld [vmem:[%s0 + $0x48] sm:$0xff]
    %v33 = vld [vmem:[%s0 + $0x50] sm:$0xff]
    %v34 = vld [vmem:[%s0 + $0x58] sm:$0xff]
    %v35 = vld [vmem:[%s0 + $0x60] sm:$0xff]
    %v36 = vld [vmem:[%s0 + $0x68] sm:$0xff]
    %v37 = vld [vmem:[%s0 + $0x70] sm:$0xff]
    %v38 = vld [vmem:[%s0 + $0x78] sm:$0xff]
    %v39 = vld [vmem:[%s0 + $0x80] sm:$0xff]
    %v40 = vld [vmem:[%s0 + $0x88] sm:$0xff]
    %v41 = vld [vmem:[%s0 + $0x90] sm:$0xff]
    %v42 = vld [vmem:[%s0 + $0x98] sm:$0xff]
    %v43 = vld [vmem:[%s0 + $0xa0] sm:$0xff]
    %v44 = vld [vmem:[%s0 + $0xa8] sm:$0xff]
    %v45 = vld [vmem:[%s0 + $0xb0] sm:$0xff]
    %v46 = vld [vmem:[%s0 + $0xb8] sm:$0xff]
    %v47 = vld [vmem:[%s0 + $0xc0] sm:$0xff]
    %v48 = vld [vmem:[%s0 + $0xc8] sm:$0xff]
    %v49 = vld [vmem:[%s0 + $0xd0] sm:$0xff]
    %v50 = vld [vmem:[%s0 + $0xd8] sm:$0xff]
    %v51 = vld [vmem:[%s0 + $0xe0] sm:$0xff]
    %v52 = vld [vmem:[%s0 + $0xe8] sm:$0xff]
    %v53 = vld [vmem:[%s0 + $0xf0] sm:$0xff]
    %v54 = vld [vmem:[%s0 + $0xf8] sm:$0xff]
    %v55 = vld [vmem:[%s1] sm:$0xff]
    %v56 = vld [vmem:[%s1 + $0x8] sm:$0xff]
    %v57 = vld [vmem:[%s1 + $0x10] sm:$0xff]
    %v58 = vld [vmem:[%s1 + $0x18] sm:$0xff]
    %v59 = vld [vmem:[%s2] sm:$0x1]
    %v61 = vlaneseq
    %v62 = vshrl.u32 %v61, 7
    %v63 = vsub.s32 0, %v62
    %v64 = vrot.slane %v59, %v63
    %vm66 = vcmask 261120
    %v68 = vsel %vm66, %v23, 0
    %v71 = vsel %vm66, %v24, 0
    %v74 = vsel %vm66, %v25, 0
    %v77 = vsel %vm66, %v26, 0
    %v80 = vsel %vm66, %v27, 0
    %v83 = vsel %vm66, %v28, 0
    %v86 = vsel %vm66, %v29, 0
    %v89 = vsel %vm66, %v30, 0
    %v92 = vsel %vm66, %v31, 0
    %v95 = vsel %vm66, %v32, 0
    %v98 = vsel %vm66, %v33, 0
    %v101 = vsel %vm66, %v34, 0
    %v104 = vsel %vm66, %v35, 0
    %v107 = vsel %vm66, %v36, 0
    %v110 = vsel %vm66, %v37, 0
    %v113 = vsel %vm66, %v38, 0
    %v116 = vsel %vm66, %v39, 0
    %v119 = vsel %vm66, %v40, 0
    %v122 = vsel %vm66, %v41, 0
    %v125 = vsel %vm66, %v42, 0
    %v128 = vsel %vm66, %v43, 0
    %v131 = vsel %vm66, %v44, 0
    %v134 = vsel %vm66, %v45, 0
    %v137 = vsel %vm66, %v46, 0
    %v140 = vsel %vm66, %v47, 0
    %v143 = vsel %vm66, %v48, 0
    %v146 = vsel %vm66, %v49, 0
    %v149 = vsel %vm66, %v50, 0
    %v152 = vsel %vm66, %v51, 0
    %v155 = vsel %vm66, %v52, 0
    %v158 = vsel %vm66, %v53, 0
    %v161 = vsel %vm66, %v54, 0
    %163 = vmatprep.subr.mxu0 0.0
    %164 = vmatpush1.msra.mxu0 0.0
    %165 = vmatprep.subr.mxu0 0.0
    %166 = vmatpush1.msra.mxu0 0.0
    %167 = vmatprep.subr.mxu0 0.0
    %168 = vmatpush1.msra.mxu0 0.0
    %169 = vmatprep.subr.mxu0 0.0
    %170 = vmatpush1.msra.mxu0 0.0
    %171 = vmatprep.subr.mxu0 0.0
    %172 = vmatpush1.msra.mxu0 0.0
    %173 = vmatprep.subr.mxu0 0.0
    %174 = vmatpush1.msra.mxu0 0.0
    %175 = vmatprep.subr.mxu0 0.0
    %176 = vmatpush1.msra.mxu0 0.0
    %177 = vmatprep.subr.mxu0 0.0
    %178 = vmatpush1.msra.mxu0 0.0
    %179 = vmatprep.subr.mxu0 0.0
    %180 = vmatpush1.msra.mxu0 0.0
    %181 = vmatprep.subr.mxu0 0.0
    %182 = vmatpush1.msra.mxu0 0.0
    %183 = vmatprep.subr.mxu0 0.0
    %184 = vmatpush1.msra.mxu0 0.0
    %185 = vmatprep.subr.mxu0 0.0
    %186 = vmatpush1.msra.mxu0 0.0
    %187 = vmatprep.subr.mxu0 0.0
    %188 = vmatpush1.msra.mxu0 %v58
    %189 = vmatprep.subr.mxu0 0.0
    %190 = vmatpush1.msra.mxu0 %v57
    %191 = vmatprep.subr.mxu0 0.0
    %192 = vmatpush1.msra.mxu0 %v56
    %193 = vmatprep.subr.mxu0 0.0
    %194 = vmatpush1.msra.mxu0 %v55
    %195 = vmatprep.subr.mxu0 0.0
    %196 = vmatpush2.msra.mxu0 0.0
    %197 = vmatprep.subr.mxu0 0.0
    %198 = vmatpush2.msra.mxu0 0.0
    %199 = vmatprep.subr.mxu0 0.0
    %200 = vmatpush2.msra.mxu0 0.0
    %201 = vmatprep.subr.mxu0 0.0
    %202 = vmatpush2.msra.mxu0 0.0
    %203 = vmatprep.subr.mxu0 0.0
    %204 = vmatpush2.msra.mxu0 0.0
    %205 = vmatprep.subr.mxu0 0.0
    %206 = vmatpush2.msra.mxu0 0.0
    %207 = vmatprep.subr.mxu0 0.0
    %208 = vmatpush2.msra.mxu0 0.0
    %209 = vmatprep.subr.mxu0 0.0
    %210 = vmatpush2.msra.mxu0 0.0
    %211 = vmatprep.subr.mxu0 0.0
    %212 = vmatpush2.msra.mxu0 0.0
    %213 = vmatprep.subr.mxu0 0.0
    %214 = vmatpush2.msra.mxu0 0.0
    %215 = vmatprep.subr.mxu0 0.0
    %216 = vmatpush2.msra.mxu0 0.0
    %217 = vmatprep.subr.mxu0 0.0
    %218 = vmatpush2.msra.mxu0 0.0
    %219 = vmatprep.subr.mxu0 0.0
    %220 = vmatpush2.msra.mxu0 0.0
    %221 = vmatprep.subr.mxu0 0.0
    %222 = vmatpush2.msra.mxu0 0.0
    %223 = vmatprep.subr.mxu0 0.0
    %224 = vmatpush2.msra.mxu0 0.0
    %225 = vmatprep.subr.mxu0 0.0
    %226 = vmatpush2.msra.mxu0 0.0
    %227 = vmatprep.mubr.f32.mxu0 0.0
    %228 = vmatmul.mubr.f32.gmra.mxu0 %v68
    %v229 = vpop.f32.mrf.mxu0
    %v230 = vadd.f32 %v64, %v229
    %v231 = vpop.f32.mrf.mxu0
    %232 = vmatprep.mubr.f32.mxu0 0.0
    %233 = vmatmul.mubr.f32.gmra.mxu0 %v71
    %v234 = vpop.f32.mrf.mxu0
    %v235 = vadd.f32 %v64, %v234
    %v236 = vpop.f32.mrf.mxu0
    %237 = vmatprep.mubr.f32.mxu0 0.0
    %238 = vmatmul.mubr.f32.gmra.mxu0 %v74
    %v239 = vpop.f32.mrf.mxu0
    %v240 = vadd.f32 %v64, %v239
    %v241 = vpop.f32.mrf.mxu0
    %242 = vmatprep.mubr.f32.mxu0 0.0
    %243 = vmatmul.mubr.f32.gmra.mxu0 %v77
    %v244 = vpop.f32.mrf.mxu0
    %v245 = vadd.f32 %v64, %v244
    %v246 = vpop.f32.mrf.mxu0
    %247 = vmatprep.mubr.f32.mxu0 0.0
    %248 = vmatmul.mubr.f32.gmra.mxu0 %v80
    %v249 = vpop.f32.mrf.mxu0
    %v250 = vadd.f32 %v64, %v249
    %v251 = vpop.f32.mrf.mxu0
    %252 = vmatprep.mubr.f32.mxu0 0.0
    %253 = vmatmul.mubr.f32.gmra.mxu0 %v83
    %v254 = vpop.f32.mrf.mxu0
    %v255 = vadd.f32 %v64, %v254
    %v256 = vpop.f32.mrf.mxu0
    %257 = vmatprep.mubr.f32.mxu0 0.0
    %258 = vmatmul.mubr.f32.gmra.mxu0 %v86
    %v259 = vpop.f32.mrf.mxu0
    %v260 = vadd.f32 %v64, %v259
    %v261 = vpop.f32.mrf.mxu0
    %262 = vmatprep.mubr.f32.mxu0 0.0
    %263 = vmatmul.mubr.f32.gmra.mxu0 %v89
    %v264 = vpop.f32.mrf.mxu0
    %v265 = vadd.f32 %v64, %v264
    %v266 = vpop.f32.mrf.mxu0
    %267 = vmatprep.mubr.f32.mxu0 0.0
    %268 = vmatmul.mubr.f32.gmra.mxu0 %v92
    %v269 = vpop.f32.mrf.mxu0
    %v270 = vadd.f32 %v64, %v269
    %v271 = vpop.f32.mrf.mxu0
    %272 = vmatprep.mubr.f32.mxu0 0.0
    %273 = vmatmul.mubr.f32.gmra.mxu0 %v95
    %v274 = vpop.f32.mrf.mxu0
    %v275 = vadd.f32 %v64, %v274
    %v276 = vpop.f32.mrf.mxu0
    %277 = vmatprep.mubr.f32.mxu0 0.0
    %278 = vmatmul.mubr.f32.gmra.mxu0 %v98
    %v279 = vpop.f32.mrf.mxu0
    %v280 = vadd.f32 %v64, %v279
    %v281 = vpop.f32.mrf.mxu0
    %282 = vmatprep.mubr.f32.mxu0 0.0
    %283 = vmatmul.mubr.f32.gmra.mxu0 %v101
    %v284 = vpop.f32.mrf.mxu0
    %v285 = vadd.f32 %v64, %v284
    %v286 = vpop.f32.mrf.mxu0
    %287 = vmatprep.mubr.f32.mxu0 0.0
    %288 = vmatmul.mubr.f32.gmra.mxu0 %v104
    %v289 = vpop.f32.mrf.mxu0
    %v290 = vadd.f32 %v64, %v289
    %v291 = vpop.f32.mrf.mxu0
    %292 = vmatprep.mubr.f32.mxu0 0.0
    %293 = vmatmul.mubr.f32.gmra.mxu0 %v107
    %v294 = vpop.f32.mrf.mxu0
    %v295 = vadd.f32 %v64, %v294
    %v296 = vpop.f32.mrf.mxu0
    %297 = vmatprep.mubr.f32.mxu0 0.0
    %298 = vmatmul.mubr.f32.gmra.mxu0 %v110
    %v299 = vpop.f32.mrf.mxu0
    %v300 = vadd.f32 %v64, %v299
    %v301 = vpop.f32.mrf.mxu0
    %302 = vmatprep.mubr.f32.mxu0 0.0
    %303 = vmatmul.mubr.f32.gmra.mxu0 %v113
    %v304 = vpop.f32.mrf.mxu0
    %v305 = vadd.f32 %v64, %v304
    %v306 = vpop.f32.mrf.mxu0
    %307 = vmatprep.mubr.f32.mxu0 0.0
    %308 = vmatmul.mubr.f32.gmra.mxu0 %v116
    %v309 = vpop.f32.mrf.mxu0
    %v310 = vadd.f32 %v64, %v309
    %v311 = vpop.f32.mrf.mxu0
    %312 = vmatprep.mubr.f32.mxu0 0.0
    %313 = vmatmul.mubr.f32.gmra.mxu0 %v119
    %v314 = vpop.f32.mrf.mxu0
    %v315 = vadd.f32 %v64, %v314
    %v316 = vpop.f32.mrf.mxu0
    %317 = vmatprep.mubr.f32.mxu0 0.0
    %318 = vmatmul.mubr.f32.gmra.mxu0 %v122
    %v319 = vpop.f32.mrf.mxu0
    %v320 = vadd.f32 %v64, %v319
    %v321 = vpop.f32.mrf.mxu0
    %322 = vmatprep.mubr.f32.mxu0 0.0
    %323 = vmatmul.mubr.f32.gmra.mxu0 %v125
    %v324 = vpop.f32.mrf.mxu0
    %v325 = vadd.f32 %v64, %v324
    %v326 = vpop.f32.mrf.mxu0
    %327 = vmatprep.mubr.f32.mxu0 0.0
    %328 = vmatmul.mubr.f32.gmra.mxu0 %v128
    %v329 = vpop.f32.mrf.mxu0
    %v330 = vadd.f32 %v64, %v329
    %v331 = vpop.f32.mrf.mxu0
    %332 = vmatprep.mubr.f32.mxu0 0.0
    %333 = vmatmul.mubr.f32.gmra.mxu0 %v131
    %v334 = vpop.f32.mrf.mxu0
    %v335 = vadd.f32 %v64, %v334
    %v336 = vpop.f32.mrf.mxu0
    %337 = vmatprep.mubr.f32.mxu0 0.0
    %338 = vmatmul.mubr.f32.gmra.mxu0 %v134
    %v339 = vpop.f32.mrf.mxu0
    %v340 = vadd.f32 %v64, %v339
    %v341 = vpop.f32.mrf.mxu0
    %342 = vmatprep.mubr.f32.mxu0 0.0
    %343 = vmatmul.mubr.f32.gmra.mxu0 %v137
    %v344 = vpop.f32.mrf.mxu0
    %v345 = vadd.f32 %v64, %v344
    %v346 = vpop.f32.mrf.mxu0
    %347 = vmatprep.mubr.f32.mxu0 0.0
    %348 = vmatmul.mubr.f32.gmra.mxu0 %v140
    %v349 = vpop.f32.mrf.mxu0
    %v350 = vadd.f32 %v64, %v349
    %v351 = vpop.f32.mrf.mxu0
    %352 = vmatprep.mubr.f32.mxu0 0.0
    %353 = vmatmul.mubr.f32.gmra.mxu0 %v143
    %v354 = vpop.f32.mrf.mxu0
    %v355 = vadd.f32 %v64, %v354
    %v356 = vpop.f32.mrf.mxu0
    %357 = vmatprep.mubr.f32.mxu0 0.0
    %358 = vmatmul.mubr.f32.gmra.mxu0 %v146
    %v359 = vpop.f32.mrf.mxu0
    %v360 = vadd.f32 %v64, %v359
    %v361 = vpop.f32.mrf.mxu0
    %362 = vmatprep.mubr.f32.mxu0 0.0
    %363 = vmatmul.mubr.f32.gmra.mxu0 %v149
    %v364 = vpop.f32.mrf.mxu0
    %v365 = vadd.f32 %v64, %v364
    %v366 = vpop.f32.mrf.mxu0
    %367 = vmatprep.mubr.f32.mxu0 0.0
    %368 = vmatmul.mubr.f32.gmra.mxu0 %v152
    %v369 = vpop.f32.mrf.mxu0
    %v370 = vadd.f32 %v64, %v369
    %v371 = vpop.f32.mrf.mxu0
    %372 = vmatprep.mubr.f32.mxu0 0.0
    %373 = vmatmul.mubr.f32.gmra.mxu0 %v155
    %v374 = vpop.f32.mrf.mxu0
    %v375 = vadd.f32 %v64, %v374
    %v376 = vpop.f32.mrf.mxu0
    %377 = vmatprep.mubr.f32.mxu0 0.0
    %378 = vmatmul.mubr.f32.gmra.mxu0 %v158
    %v379 = vpop.f32.mrf.mxu0
    %v380 = vadd.f32 %v64, %v379
    %v381 = vpop.f32.mrf.mxu0
    %382 = vmatprep.mubr.f32.mxu0 0.0
    %383 = vmatmul.mubr.f32.gmra.mxu0 %v161
    %v384 = vpop.f32.mrf.mxu0
    %v385 = vadd.f32 %v64, %v384
    %v386 = vpop.f32.mrf.mxu0
    %387 = vdwg.mxu0
    %v388 = vmax.f32 %v230, 0.0
    %v389 = vmax.f32 %v235, 0.0
    %v390 = vmax.f32 %v240, 0.0
    %v391 = vmax.f32 %v245, 0.0
    %v392 = vmax.f32 %v250, 0.0
    %v393 = vmax.f32 %v255, 0.0
    %v394 = vmax.f32 %v260, 0.0
    %v395 = vmax.f32 %v265, 0.0
    %v396 = vmax.f32 %v270, 0.0
    %v397 = vmax.f32 %v275, 0.0
    %v398 = vmax.f32 %v280, 0.0
    %v399 = vmax.f32 %v285, 0.0
    %v400 = vmax.f32 %v290, 0.0
    %v401 = vmax.f32 %v295, 0.0
    %v402 = vmax.f32 %v300, 0.0
    %v403 = vmax.f32 %v305, 0.0
    %v404 = vmax.f32 %v310, 0.0
    %v405 = vmax.f32 %v315, 0.0
    %v406 = vmax.f32 %v320, 0.0
    %v407 = vmax.f32 %v325, 0.0
    %v408 = vmax.f32 %v330, 0.0
    %v409 = vmax.f32 %v335, 0.0
    %v410 = vmax.f32 %v340, 0.0
    %v411 = vmax.f32 %v345, 0.0
    %v412 = vmax.f32 %v350, 0.0
    %v413 = vmax.f32 %v355, 0.0
    %v414 = vmax.f32 %v360, 0.0
    %v415 = vmax.f32 %v365, 0.0
    %v416 = vmax.f32 %v370, 0.0
    %v417 = vmax.f32 %v375, 0.0
    %v418 = vmax.f32 %v380, 0.0
    %v419 = vmax.f32 %v385, 0.0
    %420 = vst.msk [vmem:[%s5] sm:$0xff] %vm66, %v388
    %421 = vst.msk [vmem:[%s5 + $0x8] sm:$0xff] %vm66, %v389
    %422 = vst.msk [vmem:[%s5 + $0x10] sm:$0xff] %vm66, %v390
    %423 = vst.msk [vmem:[%s5 + $0x18] sm:$0xff] %vm66, %v391
    %424 = vst.msk [vmem:[%s5 + $0x20] sm:$0xff] %vm66, %v392
    %425 = vst.msk [vmem:[%s5 + $0x28] sm:$0xff] %vm66, %v393
    %426 = vst.msk [vmem:[%s5 + $0x30] sm:$0xff] %vm66, %v394
    %427 = vst.msk [vmem:[%s5 + $0x38] sm:$0xff] %vm66, %v395
    %428 = vst.msk [vmem:[%s5 + $0x40] sm:$0xff] %vm66, %v396
    %429 = vst.msk [vmem:[%s5 + $0x48] sm:$0xff] %vm66, %v397
    %430 = vst.msk [vmem:[%s5 + $0x50] sm:$0xff] %vm66, %v398
    %431 = vst.msk [vmem:[%s5 + $0x58] sm:$0xff] %vm66, %v399
    %432 = vst.msk [vmem:[%s5 + $0x60] sm:$0xff] %vm66, %v400
    %433 = vst.msk [vmem:[%s5 + $0x68] sm:$0xff] %vm66, %v401
    %434 = vst.msk [vmem:[%s5 + $0x70] sm:$0xff] %vm66, %v402
    %435 = vst.msk [vmem:[%s5 + $0x78] sm:$0xff] %vm66, %v403
    %436 = vst.msk [vmem:[%s5 + $0x80] sm:$0xff] %vm66, %v404
    %437 = vst.msk [vmem:[%s5 + $0x88] sm:$0xff] %vm66, %v405
    %438 = vst.msk [vmem:[%s5 + $0x90] sm:$0xff] %vm66, %v406
    %439 = vst.msk [vmem:[%s5 + $0x98] sm:$0xff] %vm66, %v407
    %440 = vst.msk [vmem:[%s5 + $0xa0] sm:$0xff] %vm66, %v408
    %441 = vst.msk [vmem:[%s5 + $0xa8] sm:$0xff] %vm66, %v409
    %442 = vst.msk [vmem:[%s5 + $0xb0] sm:$0xff] %vm66, %v410
    %443 = vst.msk [vmem:[%s5 + $0xb8] sm:$0xff] %vm66, %v411
    %444 = vst.msk [vmem:[%s5 + $0xc0] sm:$0xff] %vm66, %v412
    %445 = vst.msk [vmem:[%s5 + $0xc8] sm:$0xff] %vm66, %v413
    %446 = vst.msk [vmem:[%s5 + $0xd0] sm:$0xff] %vm66, %v414
    %447 = vst.msk [vmem:[%s5 + $0xd8] sm:$0xff] %vm66, %v415
    %448 = vst.msk [vmem:[%s5 + $0xe0] sm:$0xff] %vm66, %v416
    %449 = vst.msk [vmem:[%s5 + $0xe8] sm:$0xff] %vm66, %v417
    %450 = vst.msk [vmem:[%s5 + $0xf0] sm:$0xff] %vm66, %v418
    %451 = vst.msk [vmem:[%s5 + $0xf8] sm:$0xff] %vm66, %v419
    %v452 = vld [vmem:[%s3] sm:$0xff]
    %v453 = vld [vmem:[%s3 + $0x8] sm:$0xff]
    %v454 = vld [vmem:[%s3 + $0x10] sm:$0xff]
    %v455 = vld [vmem:[%s3 + $0x18] sm:$0xff]
    %v456 = vld [vmem:[%s4] sm:$0x1]
    %v458 = vlaneseq
    %v459 = vshrl.u32 %v458, 7
    %v460 = vsub.s32 0, %v459
    %v461 = vrot.slane %v456, %v460
    %v464 = vsel %vm66, %v388, 0
    %v467 = vsel %vm66, %v389, 0
    %v470 = vsel %vm66, %v390, 0
    %v473 = vsel %vm66, %v391, 0
    %v476 = vsel %vm66, %v392, 0
    %v479 = vsel %vm66, %v393, 0
    %v482 = vsel %vm66, %v394, 0
    %v485 = vsel %vm66, %v395, 0
    %v488 = vsel %vm66, %v396, 0
    %v491 = vsel %vm66, %v397, 0
    %v494 = vsel %vm66, %v398, 0
    %v497 = vsel %vm66, %v399, 0
    %v500 = vsel %vm66, %v400, 0
    %v503 = vsel %vm66, %v401, 0
    %v506 = vsel %vm66, %v402, 0
    %v509 = vsel %vm66, %v403, 0
    %v512 = vsel %vm66, %v404, 0
    %v515 = vsel %vm66, %v405, 0
    %v518 = vsel %vm66, %v406, 0
    %v521 = vsel %vm66, %v407, 0
    %v524 = vsel %vm66, %v408, 0
    %v527 = vsel %vm66, %v409, 0
    %v530 = vsel %vm66, %v410, 0
    %v533 = vsel %vm66, %v411, 0
    %v536 = vsel %vm66, %v412, 0
    %v539 = vsel %vm66, %v413, 0
    %v542 = vsel %vm66, %v414, 0
    %v545 = vsel %vm66, %v415, 0
    %v548 = vsel %vm66, %v416, 0
    %v551 = vsel %vm66, %v417, 0
    %v554 = vsel %vm66, %v418, 0
    %v557 = vsel %vm66, %v419, 0
    %559 = vmatprep.subr.mxu0 0.0
    %560 = vmatpush1.msra.mxu0 0.0
    %561 = vmatprep.subr.mxu0 0.0
    %562 = vmatpush1.msra.mxu0 0.0
    %563 = vmatprep.subr.mxu0 0.0
    %564 = vmatpush1.msra.mxu0 0.0
    %565 = vmatprep.subr.mxu0 0.0
    %566 = vmatpush1.msra.mxu0 0.0
    %567 = vmatprep.subr.mxu0 0.0
    %568 = vmatpush1.msra.mxu0 0.0
    %569 = vmatprep.subr.mxu0 0.0
    %570 = vmatpush1.msra.mxu0 0.0
    %571 = vmatprep.subr.mxu0 0.0
    %572 = vmatpush1.msra.mxu0 0.0
    %573 = vmatprep.subr.mxu0 0.0
    %574 = vmatpush1.msra.mxu0 0.0
    %575 = vmatprep.subr.mxu0 0.0
    %576 = vmatpush1.msra.mxu0 0.0
    %577 = vmatprep.subr.mxu0 0.0
    %578 = vmatpush1.msra.mxu0 0.0
    %579 = vmatprep.subr.mxu0 0.0
    %580 = vmatpush1.msra.mxu0 0.0
    %581 = vmatprep.subr.mxu0 0.0
    %582 = vmatpush1.msra.mxu0 0.0
    %583 = vmatprep.subr.mxu0 0.0
    %584 = vmatpush1.msra.mxu0 %v455
    %585 = vmatprep.subr.mxu0 0.0
    %586 = vmatpush1.msra.mxu0 %v454
    %587 = vmatprep.subr.mxu0 0.0
    %588 = vmatpush1.msra.mxu0 %v453
    %589 = vmatprep.subr.mxu0 0.0
    %590 = vmatpush1.msra.mxu0 %v452
    %591 = vmatprep.subr.mxu0 0.0
    %592 = vmatpush2.msra.mxu0 0.0
    %593 = vmatprep.subr.mxu0 0.0
    %594 = vmatpush2.msra.mxu0 0.0
    %595 = vmatprep.subr.mxu0 0.0
    %596 = vmatpush2.msra.mxu0 0.0
    %597 = vmatprep.subr.mxu0 0.0
    %598 = vmatpush2.msra.mxu0 0.0
    %599 = vmatprep.subr.mxu0 0.0
    %600 = vmatpush2.msra.mxu0 0.0
    %601 = vmatprep.subr.mxu0 0.0
    %602 = vmatpush2.msra.mxu0 0.0
    %603 = vmatprep.subr.mxu0 0.0
    %604 = vmatpush2.msra.mxu0 0.0
    %605 = vmatprep.subr.mxu0 0.0
    %606 = vmatpush2.msra.mxu0 0.0
    %607 = vmatprep.subr.mxu0 0.0
    %608 = vmatpush2.msra.mxu0 0.0
    %609 = vmatprep.subr.mxu0 0.0
    %610 = vmatpush2.msra.mxu0 0.0
    %611 = vmatprep.subr.mxu0 0.0
    %612 = vmatpush2.msra.mxu0 0.0
    %613 = vmatprep.subr.mxu0 0.0
    %614 = vmatpush2.msra.mxu0 0.0
    %615 = vmatprep.subr.mxu0 0.0
    %616 = vmatpush2.msra.mxu0 0.0
    %617 = vmatprep.subr.mxu0 0.0
    %618 = vmatpush2.msra.mxu0 0.0
    %619 = vmatprep.subr.mxu0 0.0
    %620 = vmatpush2.msra.mxu0 0.0
    %621 = vmatprep.subr.mxu0 0.0
    %622 = vmatpush2.msra.mxu0 0.0
    %623 = vmatprep.mubr.f32.mxu0 0.0
    %624 = vmatmul.mubr.f32.gmra.mxu0 %v464
    %v625 = vpop.f32.mrf.mxu0
    %v626 = vadd.f32 %v461, %v625
    %v627 = vpop.f32.mrf.mxu0
    %628 = vmatprep.mubr.f32.mxu0 0.0
    %629 = vmatmul.mubr.f32.gmra.mxu0 %v467
    %v630 = vpop.f32.mrf.mxu0
    %v631 = vadd.f32 %v461, %v630
    %v632 = vpop.f32.mrf.mxu0
    %633 = vmatprep.mubr.f32.mxu0 0.0
    %634 = vmatmul.mubr.f32.gmra.mxu0 %v470
    %v635 = vpop.f32.mrf.mxu0
    %v636 = vadd.f32 %v461, %v635
    %v637 = vpop.f32.mrf.mxu0
    %638 = vmatprep.mubr.f32.mxu0 0.0
    %639 = vmatmul.mubr.f32.gmra.mxu0 %v473
    %v640 = vpop.f32.mrf.mxu0
    %v641 = vadd.f32 %v461, %v640
    %v642 = vpop.f32.mrf.mxu0
    %643 = vmatprep.mubr.f32.mxu0 0.0
    %644 = vmatmul.mubr.f32.gmra.mxu0 %v476
    %v645 = vpop.f32.mrf.mxu0
    %v646 = vadd.f32 %v461, %v645
    %v647 = vpop.f32.mrf.mxu0
    %648 = vmatprep.mubr.f32.mxu0 0.0
    %649 = vmatmul.mubr.f32.gmra.mxu0 %v479
    %v650 = vpop.f32.mrf.mxu0
    %v651 = vadd.f32 %v461, %v650
    %v652 = vpop.f32.mrf.mxu0
    %653 = vmatprep.mubr.f32.mxu0 0.0
    %654 = vmatmul.mubr.f32.gmra.mxu0 %v482
    %v655 = vpop.f32.mrf.mxu0
    %v656 = vadd.f32 %v461, %v655
    %v657 = vpop.f32.mrf.mxu0
    %658 = vmatprep.mubr.f32.mxu0 0.0
    %659 = vmatmul.mubr.f32.gmra.mxu0 %v485
    %v660 = vpop.f32.mrf.mxu0
    %v661 = vadd.f32 %v461, %v660
    %v662 = vpop.f32.mrf.mxu0
    %663 = vmatprep.mubr.f32.mxu0 0.0
    %664 = vmatmul.mubr.f32.gmra.mxu0 %v488
    %v665 = vpop.f32.mrf.mxu0
    %v666 = vadd.f32 %v461, %v665
    %v667 = vpop.f32.mrf.mxu0
    %668 = vmatprep.mubr.f32.mxu0 0.0
    %669 = vmatmul.mubr.f32.gmra.mxu0 %v491
    %v670 = vpop.f32.mrf.mxu0
    %v671 = vadd.f32 %v461, %v670
    %v672 = vpop.f32.mrf.mxu0
    %673 = vmatprep.mubr.f32.mxu0 0.0
    %674 = vmatmul.mubr.f32.gmra.mxu0 %v494
    %v675 = vpop.f32.mrf.mxu0
    %v676 = vadd.f32 %v461, %v675
    %v677 = vpop.f32.mrf.mxu0
    %678 = vmatprep.mubr.f32.mxu0 0.0
    %679 = vmatmul.mubr.f32.gmra.mxu0 %v497
    %v680 = vpop.f32.mrf.mxu0
    %v681 = vadd.f32 %v461, %v680
    %v682 = vpop.f32.mrf.mxu0
    %683 = vmatprep.mubr.f32.mxu0 0.0
    %684 = vmatmul.mubr.f32.gmra.mxu0 %v500
    %v685 = vpop.f32.mrf.mxu0
    %v686 = vadd.f32 %v461, %v685
    %v687 = vpop.f32.mrf.mxu0
    %688 = vmatprep.mubr.f32.mxu0 0.0
    %689 = vmatmul.mubr.f32.gmra.mxu0 %v503
    %v690 = vpop.f32.mrf.mxu0
    %v691 = vadd.f32 %v461, %v690
    %v692 = vpop.f32.mrf.mxu0
    %693 = vmatprep.mubr.f32.mxu0 0.0
    %694 = vmatmul.mubr.f32.gmra.mxu0 %v506
    %v695 = vpop.f32.mrf.mxu0
    %v696 = vadd.f32 %v461, %v695
    %v697 = vpop.f32.mrf.mxu0
    %698 = vmatprep.mubr.f32.mxu0 0.0
    %699 = vmatmul.mubr.f32.gmra.mxu0 %v509
    %v700 = vpop.f32.mrf.mxu0
    %v701 = vadd.f32 %v461, %v700
    %v702 = vpop.f32.mrf.mxu0
    %703 = vmatprep.mubr.f32.mxu0 0.0
    %704 = vmatmul.mubr.f32.gmra.mxu0 %v512
    %v705 = vpop.f32.mrf.mxu0
    %v706 = vadd.f32 %v461, %v705
    %v707 = vpop.f32.mrf.mxu0
    %708 = vmatprep.mubr.f32.mxu0 0.0
    %709 = vmatmul.mubr.f32.gmra.mxu0 %v515
    %v710 = vpop.f32.mrf.mxu0
    %v711 = vadd.f32 %v461, %v710
    %v712 = vpop.f32.mrf.mxu0
    %713 = vmatprep.mubr.f32.mxu0 0.0
    %714 = vmatmul.mubr.f32.gmra.mxu0 %v518
    %v715 = vpop.f32.mrf.mxu0
    %v716 = vadd.f32 %v461, %v715
    %v717 = vpop.f32.mrf.mxu0
    %718 = vmatprep.mubr.f32.mxu0 0.0
    %719 = vmatmul.mubr.f32.gmra.mxu0 %v521
    %v720 = vpop.f32.mrf.mxu0
    %v721 = vadd.f32 %v461, %v720
    %v722 = vpop.f32.mrf.mxu0
    %723 = vmatprep.mubr.f32.mxu0 0.0
    %724 = vmatmul.mubr.f32.gmra.mxu0 %v524
    %v725 = vpop.f32.mrf.mxu0
    %v726 = vadd.f32 %v461, %v725
    %v727 = vpop.f32.mrf.mxu0
    %728 = vmatprep.mubr.f32.mxu0 0.0
    %729 = vmatmul.mubr.f32.gmra.mxu0 %v527
    %v730 = vpop.f32.mrf.mxu0
    %v731 = vadd.f32 %v461, %v730
    %v732 = vpop.f32.mrf.mxu0
    %733 = vmatprep.mubr.f32.mxu0 0.0
    %734 = vmatmul.mubr.f32.gmra.mxu0 %v530
    %v735 = vpop.f32.mrf.mxu0
    %v736 = vadd.f32 %v461, %v735
    %v737 = vpop.f32.mrf.mxu0
    %738 = vmatprep.mubr.f32.mxu0 0.0
    %739 = vmatmul.mubr.f32.gmra.mxu0 %v533
    %v740 = vpop.f32.mrf.mxu0
    %v741 = vadd.f32 %v461, %v740
    %v742 = vpop.f32.mrf.mxu0
    %743 = vmatprep.mubr.f32.mxu0 0.0
    %744 = vmatmul.mubr.f32.gmra.mxu0 %v536
    %v745 = vpop.f32.mrf.mxu0
    %v746 = vadd.f32 %v461, %v745
    %v747 = vpop.f32.mrf.mxu0
    %748 = vmatprep.mubr.f32.mxu0 0.0
    %749 = vmatmul.mubr.f32.gmra.mxu0 %v539
    %v750 = vpop.f32.mrf.mxu0
    %v751 = vadd.f32 %v461, %v750
    %v752 = vpop.f32.mrf.mxu0
    %753 = vmatprep.mubr.f32.mxu0 0.0
    %754 = vmatmul.mubr.f32.gmra.mxu0 %v542
    %v755 = vpop.f32.mrf.mxu0
    %v756 = vadd.f32 %v461, %v755
    %v757 = vpop.f32.mrf.mxu0
    %758 = vmatprep.mubr.f32.mxu0 0.0
    %759 = vmatmul.mubr.f32.gmra.mxu0 %v545
    %v760 = vpop.f32.mrf.mxu0
    %v761 = vadd.f32 %v461, %v760
    %v762 = vpop.f32.mrf.mxu0
    %763 = vmatprep.mubr.f32.mxu0 0.0
    %764 = vmatmul.mubr.f32.gmra.mxu0 %v548
    %v765 = vpop.f32.mrf.mxu0
    %v766 = vadd.f32 %v461, %v765
    %v767 = vpop.f32.mrf.mxu0
    %768 = vmatprep.mubr.f32.mxu0 0.0
    %769 = vmatmul.mubr.f32.gmra.mxu0 %v551
    %v770 = vpop.f32.mrf.mxu0
    %v771 = vadd.f32 %v461, %v770
    %v772 = vpop.f32.mrf.mxu0
    %773 = vmatprep.mubr.f32.mxu0 0.0
    %774 = vmatmul.mubr.f32.gmra.mxu0 %v554
    %v775 = vpop.f32.mrf.mxu0
    %v776 = vadd.f32 %v461, %v775
    %v777 = vpop.f32.mrf.mxu0
    %778 = vmatprep.mubr.f32.mxu0 0.0
    %779 = vmatmul.mubr.f32.gmra.mxu0 %v557
    %v780 = vpop.f32.mrf.mxu0
    %v781 = vadd.f32 %v461, %v780
    %v782 = vpop.f32.mrf.mxu0
    %783 = vdwg.mxu0
    %v784 = vpack.c.bf16 %v631, %v626
    %v785 = vpack.c.bf16 %v641, %v636
    %v786 = vpack.c.bf16 %v651, %v646
    %v787 = vpack.c.bf16 %v661, %v656
    %v788 = vpack.c.bf16 %v671, %v666
    %v789 = vpack.c.bf16 %v681, %v676
    %v790 = vpack.c.bf16 %v691, %v686
    %v791 = vpack.c.bf16 %v701, %v696
    %v792 = vpack.c.bf16 %v711, %v706
    %v793 = vpack.c.bf16 %v721, %v716
    %v794 = vpack.c.bf16 %v731, %v726
    %v795 = vpack.c.bf16 %v741, %v736
    %v796 = vpack.c.bf16 %v751, %v746
    %v797 = vpack.c.bf16 %v761, %v756
    %v798 = vpack.c.bf16 %v771, %v766
    %v799 = vpack.c.bf16 %v781, %v776
    %v816 = vunpack.c.l.b16 %v784
    %v817 = vunpack.c.h.b16 %v784
    %v818 = vunpack.c.l.b16 %v785
    %v819 = vunpack.c.h.b16 %v785
    %v820 = vunpack.c.l.b16 %v786
    %v821 = vunpack.c.h.b16 %v786
    %v822 = vunpack.c.l.b16 %v787
    %v823 = vunpack.c.h.b16 %v787
    %v824 = vunpack.c.l.b16 %v788
    %v825 = vunpack.c.h.b16 %v788
    %v826 = vunpack.c.l.b16 %v789
    %v827 = vunpack.c.h.b16 %v789
    %v828 = vunpack.c.l.b16 %v790
    %v829 = vunpack.c.h.b16 %v790
    %v830 = vunpack.c.l.b16 %v791
    %v831 = vunpack.c.h.b16 %v791
    %v832 = vunpack.c.l.b16 %v792
    %v833 = vunpack.c.h.b16 %v792
    %v834 = vunpack.c.l.b16 %v793
    %v835 = vunpack.c.h.b16 %v793
    %v836 = vunpack.c.l.b16 %v794
    %v837 = vunpack.c.h.b16 %v794
    %v838 = vunpack.c.l.b16 %v795
    %v839 = vunpack.c.h.b16 %v795
    %v840 = vunpack.c.l.b16 %v796
    %v841 = vunpack.c.h.b16 %v796
    %v842 = vunpack.c.l.b16 %v797
    %v843 = vunpack.c.h.b16 %v797
    %v844 = vunpack.c.l.b16 %v798
    %v845 = vunpack.c.h.b16 %v798
    %v846 = vunpack.c.l.b16 %v799
    %v847 = vunpack.c.h.b16 %v799
    %v848 = vpack.c.b16 %v816, %v816
    %v849 = vpack.c.b16 %v817, %v817
    %v850 = vpack.c.b16 %v818, %v818
    %v851 = vpack.c.b16 %v819, %v819
    %v852 = vpack.c.b16 %v820, %v820
    %v853 = vpack.c.b16 %v821, %v821
    %v854 = vpack.c.b16 %v822, %v822
    %v855 = vpack.c.b16 %v823, %v823
    %v856 = vpack.c.b16 %v824, %v824
    %v857 = vpack.c.b16 %v825, %v825
    %v858 = vpack.c.b16 %v826, %v826
    %v859 = vpack.c.b16 %v827, %v827
    %v860 = vpack.c.b16 %v828, %v828
    %v861 = vpack.c.b16 %v829, %v829
    %v862 = vpack.c.b16 %v830, %v830
    %v863 = vpack.c.b16 %v831, %v831
    %v864 = vpack.c.b16 %v832, %v832
    %v865 = vpack.c.b16 %v833, %v833
    %v866 = vpack.c.b16 %v834, %v834
    %v867 = vpack.c.b16 %v835, %v835
    %v868 = vpack.c.b16 %v836, %v836
    %v869 = vpack.c.b16 %v837, %v837
    %v870 = vpack.c.b16 %v838, %v838
    %v871 = vpack.c.b16 %v839, %v839
    %v872 = vpack.c.b16 %v840, %v840
    %v873 = vpack.c.b16 %v841, %v841
    %v874 = vpack.c.b16 %v842, %v842
    %v875 = vpack.c.b16 %v843, %v843
    %v876 = vpack.c.b16 %v844, %v844
    %v877 = vpack.c.b16 %v845, %v845
    %v878 = vpack.c.b16 %v846, %v846
    %v879 = vpack.c.b16 %v847, %v847
    %912 = vst [vmem:[#allocation2] sm:$0xf] %v848
    %913 = vst [vmem:[#allocation2 + $0x4] sm:$0xf] %v849
    %914 = vst [vmem:[#allocation2 + $0x8] sm:$0xf] %v850
    %915 = vst [vmem:[#allocation2 + $0xc] sm:$0xf] %v851
    %916 = vst [vmem:[#allocation2 + $0x10] sm:$0xf] %v852
    %917 = vst [vmem:[#allocation2 + $0x14] sm:$0xf] %v853
    %918 = vst [vmem:[#allocation2 + $0x18] sm:$0xf] %v854
    %919 = vst [vmem:[#allocation2 + $0x1c] sm:$0xf] %v855
    %920 = vst [vmem:[#allocation2 + $0x20] sm:$0xf] %v856
    %921 = vst [vmem:[#allocation2 + $0x24] sm:$0xf] %v857
    %922 = vst [vmem:[#allocation2 + $0x28] sm:$0xf] %v858
    %923 = vst [vmem:[#allocation2 + $0x2c] sm:$0xf] %v859
    %924 = vst [vmem:[#allocation2 + $0x30] sm:$0xf] %v860
    %925 = vst [vmem:[#allocation2 + $0x34] sm:$0xf] %v861
    %926 = vst [vmem:[#allocation2 + $0x38] sm:$0xf] %v862
    %927 = vst [vmem:[#allocation2 + $0x3c] sm:$0xf] %v863
    %928 = vst [vmem:[#allocation2 + $0x40] sm:$0xf] %v864
    %929 = vst [vmem:[#allocation2 + $0x44] sm:$0xf] %v865
    %930 = vst [vmem:[#allocation2 + $0x48] sm:$0xf] %v866
    %931 = vst [vmem:[#allocation2 + $0x4c] sm:$0xf] %v867
    %932 = vst [vmem:[#allocation2 + $0x50] sm:$0xf] %v868
    %933 = vst [vmem:[#allocation2 + $0x54] sm:$0xf] %v869
    %934 = vst [vmem:[#allocation2 + $0x58] sm:$0xf] %v870
    %935 = vst [vmem:[#allocation2 + $0x5c] sm:$0xf] %v871
    %936 = vst [vmem:[#allocation2 + $0x60] sm:$0xf] %v872
    %937 = vst [vmem:[#allocation2 + $0x64] sm:$0xf] %v873
    %938 = vst [vmem:[#allocation2 + $0x68] sm:$0xf] %v874
    %939 = vst [vmem:[#allocation2 + $0x6c] sm:$0xf] %v875
    %940 = vst [vmem:[#allocation2 + $0x70] sm:$0xf] %v876
    %941 = vst [vmem:[#allocation2 + $0x74] sm:$0xf] %v877
    %942 = vst [vmem:[#allocation2 + $0x78] sm:$0xf] %v878
    %943 = vst [vmem:[#allocation2 + $0x7c] sm:$0xf] %v879
    // Predicated region
    $region22: #{tpu_custom_call.1} parent=1 // pred_check
      _
    $region23: #{tpu_custom_call.1} parent=1 // pred_check_branch
      %945 = sbr.rel (0) target = $region25
    $region24: #{tpu_custom_call.1} parent=1 // pred_region
      _
    $region25: #{tpu_custom_call.1} parent=1 // pred_fallthru
      _
    // Predicated region
    $region26: #{tpu_custom_call.1} parent=1 // pred_check
      _
    $region27: #{tpu_custom_call.1} parent=1 // pred_check_branch
      %947 = sbr.rel (0) target = $region29
    $region28: #{tpu_custom_call.1} parent=1 // pred_region
      %s949 = ssub.s32 2048, 2048
      %950 = vsyncadd [#allocation3], %s949
      %s951 = sshll.u32 [#allocation2], 4
      %s952 = int_to_ptr.vmem [resolvable:$true] %s951
      %957 = dma.vmem_to_hbm [thread:$0]  %s952, 2048, %s6, [#allocation3], 64, 64, 4
    $region29: #{tpu_custom_call.1} parent=1 // pred_fallthru
      _
    // Predicated region
    $region30: #{tpu_custom_call.1} parent=1 // pred_check
      _
    $region31: #{tpu_custom_call.1} parent=1 // pred_check_branch
      %959 = sbr.rel (0) target = $region33
    $region32: #{tpu_custom_call.1} parent=1 // pred_region
      _
    $region33: #{tpu_custom_call.1} parent=1 // pred_fallthru
      _
    // Predicated region
    $region34: #{tpu_custom_call.1} parent=1 // pred_check
      _
    $region35: #{tpu_custom_call.1} parent=1 // pred_check_branch
      %961 = sbr.rel (0) target = $region37
    $region36: #{tpu_custom_call.1} parent=1 // pred_region
      %962 = dma.done [#allocation3], 2048
    $region37: #{tpu_custom_call.1} parent=1 // pred_fallthru
      _
    %963 = vsyncpa [#allocation3], 1

</llo_original>
